<compile_context>
chip_gen: v5e
topology: v5e:2x2
jax: 0.10.0
libtpu: 0.0.40
codegen_flags: <defaults>
</compile_context>

<pallas_src>
import functools

import jax
import jax.numpy as jnp
from jax import lax
from jax.experimental import pallas as pl
from jax.experimental.pallas import tpu as pltpu

_EPS = 1e-8          # torch F.cosine_similarity eps
_NEG_INF = -1e30


def _round_up(x, m):
    return (x + m - 1) // m * m


def _vmem_capacity_bytes():
    """Physical VMEM of the local TPU generation; conservative fallback (v7x-sized)."""
    try:
        return int(pltpu.get_tpu_info().vmem_capacity_bytes)
    except Exception:
        return 64 * 1024 * 1024


def _info_nce_kernel(a_ref, p_ref, a3_ref, n_ref, out_ref,
                     posl_ref, ainv_ref, m_ref, s_ref,
                     *, inv_temp, n_valid, tn, tb, mask_n):
    ni = pl.program_id(1)
    inv_eps = 1.0 / _EPS

    @pl.when(ni == 0)
    def _init():
        a = a_ref[...].astype(jnp.float32)                    # (TB, Dp)
        p = p_ref[...].astype(jnp.float32)
        a_sq = jnp.sum(a * a, axis=-1, keepdims=True)         # (TB, 1)
        p_sq = jnp.sum(p * p, axis=-1, keepdims=True)
        a_inv = jnp.minimum(lax.rsqrt(a_sq), inv_eps)         # = 1 / max(||a||, eps)
        p_inv = jnp.minimum(lax.rsqrt(p_sq), inv_eps)
        pos_l = jnp.sum(a * p, axis=-1, keepdims=True) * (a_inv * p_inv) * inv_temp
        ainv_ref[...] = a_inv
        posl_ref[...] = pos_l
        m_ref[...] = pos_l                                    # running max (covers positive logit)
        s_ref[...] = jnp.ones_like(pos_l)                     # exp(pos_l - m) == 1

    negs = n_ref[...]                                         # (TB, TN, Dp), input dtype
    anc = a3_ref[...]                                         # (TB, 1, Dp), input dtype

    # Both D-contractions in one fused VPU-multiply + lane-reduce pass, f32 accumulation.
    # (Replaces the per-row M=1 MXU loop + concatenate; see header for the MXU variant.)
    n_sq = jnp.sum(negs * negs, axis=-1, dtype=jnp.float32)       # (TB, TN)
    neg_dot = jnp.sum(negs * anc, axis=-1, dtype=jnp.float32)     # (TB, TN), sublane bcast of anc

    n_inv = jnp.minimum(lax.rsqrt(n_sq), inv_eps)
    neg_l = neg_dot * (ainv_ref[...] * n_inv) * inv_temp          # (TB, TN)

    if mask_n:  # only compiled in when Np != N; ~3 VPU ops per output element
        col = ni * tn + lax.broadcasted_iota(jnp.int32, (tb, tn), 1)
        neg_l = jnp.where(col < n_valid, neg_l, _NEG_INF)

    # Online logsumexp update across the N tiles.
    m_prev = m_ref[...]
    m_new = jnp.maximum(m_prev, jnp.max(neg_l, axis=-1, keepdims=True))
    s_ref[...] = (s_ref[...] * jnp.exp(m_prev - m_new)
                  + jnp.sum(jnp.exp(neg_l - m_new), axis=-1, keepdims=True))
    m_ref[...] = m_new

    @pl.when(ni == pl.num_programs(1) - 1)
    def _finalize():
        out_ref[...] = m_ref[...] + jnp.log(s_ref[...]) - posl_ref[...]   # per-sample loss


def info_nce_loss(anchor, positive, negatives, temperature=0.1, *, neg_tile_bytes=None):
    """anchor, positive: (B, D); negatives: (B, N, D) -> scalar InfoNCE loss."""
    B, D = anchor.shape
    _, N, _ = negatives.shape

    # Generation-aware VMEM sizing (review): big streamed tiles on 128-MiB parts
    # (v5e/v6e ~12.8 MiB), bounded ones on v7x's 64-MiB VMEM (~6.4 MiB); scoped limit
    # 96 MiB on v5e/v6e, ~48 MiB on v7x. Tile budget is in f32 working-set bytes so the
    # f32 reduction intermediates fit even for bf16 inputs.
    vmem_cap = _vmem_capacity_bytes()
    if neg_tile_bytes is None:
        neg_tile_bytes = int(min(16 * 1024 * 1024, max(4 * 1024 * 1024, vmem_cap // 10)))
    vmem_limit = int(min(96 * 1024 * 1024, vmem_cap * 3 // 4))

    Dp = _round_up(D, 128)                        # lane-dense feature axis

    # Batch tile: up to 32 rows, but keep >=2 B-tiles when B allows so both v7x
    # TensorCores get work along the "parallel" grid axis.
    TB = max(8, min(32, _round_up((B + 1) // 2, 8)))
    tn_cap = max(8, (neg_tile_bytes // (TB * Dp * 4)) // 8 * 8)
    # Keep the streamed tile lane-rich: if TN would drop below ~128 while the problem
    # actually has that many negatives, trade TB for TN.
    while TB > 8 and tn_cap < min(128, _round_up(N, 8)):
        TB = max(8, (TB // 2) // 8 * 8)
        tn_cap = max(8, (neg_tile_bytes // (TB * Dp * 4)) // 8 * 8)
    TN = min(_round_up(N, 8), tn_cap)

    Bp = _round_up(B, TB)
    Np = _round_up(N, TN)

    if (Bp, Dp) != (B, D):
        anchor = jnp.pad(anchor, ((0, Bp - B), (0, Dp - D)))
        positive = jnp.pad(positive, ((0, Bp - B), (0, Dp - D)))
    if (Bp, Np, Dp) != (B, N, D):
        negatives = jnp.pad(negatives, ((0, Bp - B), (0, Np - N), (0, Dp - D)))
    # (Bp, 1, Dp) view of the anchor: in-kernel broadcast against (TB, TN, Dp) is then
    # a plain sublane broadcast — no in-kernel reshape/relayout.
    anchor3 = anchor.reshape(Bp, 1, Dp)

    grid = (Bp // TB, Np // TN)
    kernel = functools.partial(
        _info_nce_kernel,
        inv_temp=float(1.0 / temperature),
        n_valid=N, tn=TN, tb=TB, mask_n=(Np != N))

    itemsize = jnp.dtype(negatives.dtype).itemsize
    cost = pl.CostEstimate(
        flops=int(4 * Bp * Np * Dp + 8 * Bp * Dp),
        transcendentals=int(Bp * Np + 8 * Bp),
        bytes_accessed=int(itemsize * (Bp * Np * Dp + 3 * Bp * Dp) + 4 * Bp))

    per_sample = pl.pallas_call(
        kernel,
        out_shape=jax.ShapeDtypeStruct((Bp, 1), jnp.float32),
        grid=grid,
        in_specs=[
            pl.BlockSpec((TB, Dp), lambda bi, ni: (bi, 0)),          # anchor (2-D, for norms)
            pl.BlockSpec((TB, Dp), lambda bi, ni: (bi, 0)),          # positive
            pl.BlockSpec((TB, 1, Dp), lambda bi, ni: (bi, 0, 0)),    # anchor (3-D bcast view)
            pl.BlockSpec((TB, TN, Dp), lambda bi, ni: (bi, ni, 0)),  # negatives (streamed)
        ],
        out_specs=pl.BlockSpec((TB, 1), lambda bi, ni: (bi, 0)),
        scratch_shapes=[
            pltpu.VMEM((TB, 1), jnp.float32),   # positive logit
            pltpu.VMEM((TB, 1), jnp.float32),   # 1 / max(||anchor||, eps)
            pltpu.VMEM((TB, 1), jnp.float32),   # running max
            pltpu.VMEM((TB, 1), jnp.float32),   # running sum of exp
        ],
        compiler_params=pltpu.CompilerParams(
            dimension_semantics=("parallel", "arbitrary"),
            vmem_limit_bytes=vmem_limit),
        cost_estimate=cost,
    )(anchor, positive, anchor3, negatives)

    return jnp.mean(per_sample[:B, 0])


def _reference_info_nce(anchor, positive, negatives, temperature=0.1):
    """Plain-JAX reference mirroring the torch module, for verification."""
    def cos(x, y):
        xn = jnp.maximum(jnp.linalg.norm(x, axis=-1), _EPS)
        yn = jnp.maximum(jnp.linalg.norm(y, axis=-1), _EPS)
        return jnp.sum(x * y, axis=-1) / (xn * yn)

    pos_sim = cos(anchor, positive)[:, None]                     # (B, 1)
    neg_sim = cos(anchor[:, None, :], negatives)                 # (B, N)
    sims = jnp.concatenate([pos_sim, neg_sim], axis=1) / temperature
    probs = jax.nn.softmax(sims, axis=1)
    return -jnp.mean(jnp.log(probs[:, 0]))


if __name__ == "__main__":
    key = jax.random.PRNGKey(0)
    k1, k2, k3 = jax.random.split(key, 3)

    # Small shapes consistent with the module: batch=4, negatives=8, hidden=32.
    B, N, D = 4, 8, 32
    anchor = jax.random.normal(k1, (B, D), dtype=jnp.float32)
    positive = jax.random.normal(k2, (B, D), dtype=jnp.float32)
    negatives = jax.random.normal(k3, (B, N, D), dtype=jnp.float32)

    loss = jax.block_until_ready(info_nce_loss(anchor, positive, negatives, temperature=0.1))
    ref = _reference_info_nce(anchor, positive, negatives, temperature=0.1)
    assert jnp.allclose(loss, ref, rtol=1e-4, atol=1e-4), (loss, ref)

    # Exercise the multi-tile / padded path: several N tiles, padded B/N/D, online
    # logsumexp across tiles and last-tile column masking.
    B2, N2, D2 = 12, 20, 40
    k4, k5, k6 = jax.random.split(k3, 3)
    a2 = jax.random.normal(k4, (B2, D2), dtype=jnp.float32)
    p2 = jax.random.normal(k5, (B2, D2), dtype=jnp.float32)
    n2 = jax.random.normal(k6, (B2, N2, D2), dtype=jnp.float32)
    loss2 = jax.block_until_ready(
        info_nce_loss(a2, p2, n2, temperature=0.07, neg_tile_bytes=32 * 1024))
    ref2 = _reference_info_nce(a2, p2, n2, temperature=0.07)
    assert jnp.allclose(loss2, ref2, rtol=1e-4, atol=1e-4), (loss2, ref2)

    print("KERNEL_OK")
</pallas_src>

<mosaic_0001>
module attributes {stable_mosaic.version = 11 : i64} {
  func.func @_info_nce_kernel(%arg0: i32, %arg1: i32, %arg2: memref<8x128xf32, #tpu.memory_space<vmem>>, %arg3: memref<8x128xf32, #tpu.memory_space<vmem>>, %arg4: memref<8x1x128xf32, #tpu.memory_space<vmem>>, %arg5: memref<8x8x128xf32, #tpu.memory_space<vmem>>, %arg6: memref<8x1xf32, #tpu.memory_space<vmem>>, %arg7: memref<8x1xf32, #tpu.memory_space<vmem>>, %arg8: memref<8x1xf32, #tpu.memory_space<vmem>>, %arg9: memref<8x1xf32, #tpu.memory_space<vmem>>, %arg10: memref<8x1xf32, #tpu.memory_space<vmem>>) attributes {dimension_semantics = [#tpu.dimension_semantics<parallel>, #tpu.dimension_semantics<arbitrary>], iteration_bounds = array<i64: 1, 1>, scalar_prefetch = 0 : i64, scratch_operands = 4 : i64, tpu.core_type = #tpu.core_type<tc>, window_params = [{transform_indices = @transform_0, window_bounds = array<i64: 8, 128>}, {transform_indices = @transform_1, window_bounds = array<i64: 8, 128>}, {transform_indices = @transform_2, window_bounds = array<i64: 8, 1, 128>}, {transform_indices = @transform_3, window_bounds = array<i64: 8, 8, 128>}, {transform_indices = @transform_4, window_bounds = array<i64: 8, 1>}]} {
    %c0_i32 = arith.constant 0 : i32
    %0 = arith.cmpi eq, %arg1, %c0_i32 : i32
    %1 = arith.extui %0 : i1 to i32
    %c0_i32_0 = arith.constant 0 : i32
    %2 = arith.cmpi ne, %1, %c0_i32_0 : i32
    scf.if %2 {
      %c0_23 = arith.constant 0 : index
      %c0_24 = arith.constant 0 : index
      %38 = vector.load %arg2[%c0_23, %c0_24] : memref<8x128xf32, #tpu.memory_space<vmem>>, vector<8x128xf32>
      %c0_25 = arith.constant 0 : index
      %c0_26 = arith.constant 0 : index
      %39 = vector.load %arg3[%c0_25, %c0_26] : memref<8x128xf32, #tpu.memory_space<vmem>>, vector<8x128xf32>
      %40 = arith.mulf %38, %38 : vector<8x128xf32>
      %cst_27 = arith.constant dense<0.000000e+00> : vector<8xf32>
      %41 = vector.multi_reduction <add>, %40, %cst_27 [1] : vector<8x128xf32> to vector<8xf32>
      %42 = vector.shape_cast %41 : vector<8xf32> to vector<8x1xf32>
      %43 = arith.mulf %39, %39 : vector<8x128xf32>
      %cst_28 = arith.constant dense<0.000000e+00> : vector<8xf32>
      %44 = vector.multi_reduction <add>, %43, %cst_28 [1] : vector<8x128xf32> to vector<8xf32>
      %45 = vector.shape_cast %44 : vector<8xf32> to vector<8x1xf32>
      %46 = math.rsqrt %42 : vector<8x1xf32>
      %cst_29 = arith.constant 1.000000e+08 : f32
      %47 = vector.broadcast %cst_29 : f32 to vector<8x1xf32>
      %48 = arith.minimumf %46, %47 : vector<8x1xf32>
      %49 = math.rsqrt %45 : vector<8x1xf32>
      %cst_30 = arith.constant 1.000000e+08 : f32
      %50 = vector.broadcast %cst_30 : f32 to vector<8x1xf32>
      %51 = arith.minimumf %49, %50 : vector<8x1xf32>
      %52 = arith.mulf %38, %39 : vector<8x128xf32>
      %cst_31 = arith.constant dense<0.000000e+00> : vector<8xf32>
      %53 = vector.multi_reduction <add>, %52, %cst_31 [1] : vector<8x128xf32> to vector<8xf32>
      %54 = vector.shape_cast %53 : vector<8xf32> to vector<8x1xf32>
      %55 = arith.mulf %48, %51 : vector<8x1xf32>
      %56 = arith.mulf %54, %55 : vector<8x1xf32>
      %cst_32 = arith.constant 1.000000e+01 : f32
      %57 = vector.broadcast %cst_32 : f32 to vector<8x1xf32>
      %58 = arith.mulf %56, %57 : vector<8x1xf32>
      %c0_33 = arith.constant 0 : index
      %c0_34 = arith.constant 0 : index
      %59 = vector.load %arg8[%c0_33, %c0_34] : memref<8x1xf32, #tpu.memory_space<vmem>>, vector<8x1xf32>
      tpu.vector_store %arg8[%c0_33, %c0_34], %48 {strides = array<i32>} : memref<8x1xf32, #tpu.memory_space<vmem>>, vector<8x1xf32>,
      %c0_35 = arith.constant 0 : index
      %c0_36 = arith.constant 0 : index
      %60 = vector.load %arg7[%c0_35, %c0_36] : memref<8x1xf32, #tpu.memory_space<vmem>>, vector<8x1xf32>
      tpu.vector_store %arg7[%c0_35, %c0_36], %58 {strides = array<i32>} : memref<8x1xf32, #tpu.memory_space<vmem>>, vector<8x1xf32>,
      %c0_37 = arith.constant 0 : index
      %c0_38 = arith.constant 0 : index
      %61 = vector.load %arg9[%c0_37, %c0_38] : memref<8x1xf32, #tpu.memory_space<vmem>>, vector<8x1xf32>
      tpu.vector_store %arg9[%c0_37, %c0_38], %58 {strides = array<i32>} : memref<8x1xf32, #tpu.memory_space<vmem>>, vector<8x1xf32>,
      %cst_39 = arith.constant 1.000000e+00 : f32
      %62 = vector.broadcast %cst_39 : f32 to vector<8x1xf32>
      %c0_40 = arith.constant 0 : index
      %c0_41 = arith.constant 0 : index
      %63 = vector.load %arg10[%c0_40, %c0_41] : memref<8x1xf32, #tpu.memory_space<vmem>>, vector<8x1xf32>
      tpu.vector_store %arg10[%c0_40, %c0_41], %62 {strides = array<i32>} : memref<8x1xf32, #tpu.memory_space<vmem>>, vector<8x1xf32>,
    } else {
    }
    %c0 = arith.constant 0 : index
    %c0_1 = arith.constant 0 : index
    %c0_2 = arith.constant 0 : index
    %3 = vector.load %arg5[%c0, %c0_1, %c0_2] : memref<8x8x128xf32, #tpu.memory_space<vmem>>, vector<8x8x128xf32>
    %c0_3 = arith.constant 0 : index
    %c0_4 = arith.constant 0 : index
    %c0_5 = arith.constant 0 : index
    %4 = vector.load %arg4[%c0_3, %c0_4, %c0_5] : memref<8x1x128xf32, #tpu.memory_space<vmem>>, vector<8x1x128xf32>
    %5 = arith.mulf %3, %3 : vector<8x8x128xf32>
    %cst = arith.constant dense<0.000000e+00> : vector<8x8xf32>
    %6 = vector.multi_reduction <add>, %5, %cst [2] : vector<8x8x128xf32> to vector<8x8xf32>
    %7 = vector.broadcast %4 : vector<8x1x128xf32> to vector<8x8x128xf32>
    %8 = arith.mulf %3, %7 : vector<8x8x128xf32>
    %cst_6 = arith.constant dense<0.000000e+00> : vector<8x8xf32>
    %9 = vector.multi_reduction <add>, %8, %cst_6 [2] : vector<8x8x128xf32> to vector<8x8xf32>
    %10 = math.rsqrt %6 : vector<8x8xf32>
    %cst_7 = arith.constant 1.000000e+08 : f32
    %11 = vector.broadcast %cst_7 : f32 to vector<8x8xf32>
    %12 = arith.minimumf %10, %11 : vector<8x8xf32>
    %c0_8 = arith.constant 0 : index
    %c0_9 = arith.constant 0 : index
    %13 = vector.load %arg8[%c0_8, %c0_9] : memref<8x1xf32, #tpu.memory_space<vmem>>, vector<8x1xf32>
    %14 = vector.broadcast %13 : vector<8x1xf32> to vector<8x8xf32>
    %15 = arith.mulf %14, %12 : vector<8x8xf32>
    %16 = arith.mulf %9, %15 : vector<8x8xf32>
    %cst_10 = arith.constant 1.000000e+01 : f32
    %17 = vector.broadcast %cst_10 : f32 to vector<8x8xf32>
    %18 = arith.mulf %16, %17 : vector<8x8xf32>
    %c0_11 = arith.constant 0 : index
    %c0_12 = arith.constant 0 : index
    %19 = vector.load %arg9[%c0_11, %c0_12] : memref<8x1xf32, #tpu.memory_space<vmem>>, vector<8x1xf32>
    %cst_13 = arith.constant dense<0xFF800000> : vector<8xf32>
    %20 = vector.multi_reduction <maximumf>, %18, %cst_13 [1] : vector<8x8xf32> to vector<8xf32>
    %21 = vector.shape_cast %20 : vector<8xf32> to vector<8x1xf32>
    %22 = arith.maximumf %19, %21 : vector<8x1xf32>
    %c0_14 = arith.constant 0 : index
    %c0_15 = arith.constant 0 : index
    %23 = vector.load %arg10[%c0_14, %c0_15] : memref<8x1xf32, #tpu.memory_space<vmem>>, vector<8x1xf32>
    %24 = arith.subf %19, %22 : vector<8x1xf32>
    %25 = math.exp %24 : vector<8x1xf32>
    %26 = arith.mulf %23, %25 : vector<8x1xf32>
    %27 = vector.broadcast %22 : vector<8x1xf32> to vector<8x8xf32>
    %28 = arith.subf %18, %27 : vector<8x8xf32>
    %29 = math.exp %28 : vector<8x8xf32>
    %cst_16 = arith.constant dense<0.000000e+00> : vector<8xf32>
    %30 = vector.multi_reduction <add>, %29, %cst_16 [1] : vector<8x8xf32> to vector<8xf32>
    %31 = vector.shape_cast %30 : vector<8xf32> to vector<8x1xf32>
    %32 = arith.addf %26, %31 : vector<8x1xf32>
    %c0_17 = arith.constant 0 : index
    %c0_18 = arith.constant 0 : index
    %33 = vector.load %arg10[%c0_17, %c0_18] : memref<8x1xf32, #tpu.memory_space<vmem>>, vector<8x1xf32>
    tpu.vector_store %arg10[%c0_17, %c0_18], %32 {strides = array<i32>} : memref<8x1xf32, #tpu.memory_space<vmem>>, vector<8x1xf32>,
    %c0_19 = arith.constant 0 : index
    %c0_20 = arith.constant 0 : index
    %34 = vector.load %arg9[%c0_19, %c0_20] : memref<8x1xf32, #tpu.memory_space<vmem>>, vector<8x1xf32>
    tpu.vector_store %arg9[%c0_19, %c0_20], %22 {strides = array<i32>} : memref<8x1xf32, #tpu.memory_space<vmem>>, vector<8x1xf32>,
    %c0_i32_21 = arith.constant 0 : i32
    %35 = arith.cmpi eq, %arg1, %c0_i32_21 : i32
    %36 = arith.extui %35 : i1 to i32
    %c0_i32_22 = arith.constant 0 : i32
    %37 = arith.cmpi ne, %36, %c0_i32_22 : i32
    scf.if %37 {
      %c0_23 = arith.constant 0 : index
      %c0_24 = arith.constant 0 : index
      %38 = vector.load %arg9[%c0_23, %c0_24] : memref<8x1xf32, #tpu.memory_space<vmem>>, vector<8x1xf32>
      %c0_25 = arith.constant 0 : index
      %c0_26 = arith.constant 0 : index
      %39 = vector.load %arg10[%c0_25, %c0_26] : memref<8x1xf32, #tpu.memory_space<vmem>>, vector<8x1xf32>
      %40 = math.log %39 : vector<8x1xf32>
      %41 = arith.addf %38, %40 : vector<8x1xf32>
      %c0_27 = arith.constant 0 : index
      %c0_28 = arith.constant 0 : index
      %42 = vector.load %arg7[%c0_27, %c0_28] : memref<8x1xf32, #tpu.memory_space<vmem>>, vector<8x1xf32>
      %43 = arith.subf %41, %42 : vector<8x1xf32>
      %c0_29 = arith.constant 0 : index
      %c0_30 = arith.constant 0 : index
      %44 = vector.load %arg6[%c0_29, %c0_30] : memref<8x1xf32, #tpu.memory_space<vmem>>, vector<8x1xf32>
      tpu.vector_store %arg6[%c0_29, %c0_30], %43 {strides = array<i32>} : memref<8x1xf32, #tpu.memory_space<vmem>>, vector<8x1xf32>,
    } else {
    }
    return
  }
  func.func @transform_0(%arg0: i32, %arg1: i32) -> (i32, i32) {
    %c0_i32 = arith.constant 0 : i32
    %c0_i32_0 = arith.constant 0 : i32
    return %arg0, %c0_i32 : i32, i32
  }
  func.func @transform_1(%arg0: i32, %arg1: i32) -> (i32, i32) {
    %c0_i32 = arith.constant 0 : i32
    %c0_i32_0 = arith.constant 0 : i32
    return %arg0, %c0_i32 : i32, i32
  }
  func.func @transform_2(%arg0: i32, %arg1: i32) -> (i32, i32, i32) {
    %c0_i32 = arith.constant 0 : i32
    %c0_i32_0 = arith.constant 0 : i32
    %c0_i32_1 = arith.constant 0 : i32
    return %arg0, %c0_i32, %c0_i32_0 : i32, i32, i32
  }
  func.func @transform_3(%arg0: i32, %arg1: i32) -> (i32, i32, i32) {
    %c0_i32 = arith.constant 0 : i32
    %c0_i32_0 = arith.constant 0 : i32
    return %arg0, %arg1, %c0_i32 : i32, i32, i32
  }
  func.func @transform_4(%arg0: i32, %arg1: i32) -> (i32, i32) {
    %c0_i32 = arith.constant 0 : i32
    %c0_i32_0 = arith.constant 0 : i32
    return %arg0, %c0_i32 : i32, i32
  }
}

</mosaic_0001>

<llo_original>
// kernel: tpu_custom_call.1
$region0: #{tpu_custom_call.1}
  #allocation0 [shape = 'u32[]', space=smem, size = 0x4, offset = 0x4, fixed_abs, tag = 'smem constant byte address 0x4 - core index']
  #allocation1 [shape = 'u32[72,128]{1,0:T(1,128)}', space=vmem, size = 0x9000, scoped, tag = 'internal scratch']
  #allocation2 [shape = 'f32[8,1]{1,0:T(8,128)}', space=vmem, size = 0x1000, scoped, tag = 'scratch operand']
  #allocation3 [shape = 'f32[8,1]{1,0:T(8,128)}', space=vmem, size = 0x1000, scoped, tag = 'scratch operand']
  #allocation4 [shape = 'f32[8,1]{1,0:T(8,128)}', space=vmem, size = 0x1000, scoped, tag = 'scratch operand']
  #allocation5 [shape = 'f32[8,1]{1,0:T(8,128)}', space=vmem, size = 0x1000, scoped, tag = 'scratch operand']
  %s0 = inlined_call_operand.hbm [shape: f32[8,128], index: 0, kind: input, shape index: {}]
  %s1 = inlined_call_operand.hbm [shape: f32[8,128], index: 1, kind: input, shape index: {}]
  %s2 = inlined_call_operand.hbm [shape: f32[8,1,128], index: 2, kind: input, shape index: {}]
  %s3 = inlined_call_operand.hbm [shape: f32[8,8,128], index: 3, kind: input, shape index: {}]
  %s4 = inlined_call_operand.vmem [shape: f32[8,1], index: 4, kind: output, shape index: {}]
  %s5 = sld [smem:[#allocation0]]
  $region50: #{tpu_custom_call.1} parent=0
    _
  %s7 = ssub.s32 1, %s5
  %s8 = scalar_select 0, %s7, %s5
  $region1: #{tpu_custom_call.1} parent=0
    #allocation6 [shape = 'u8[4096]{0}', space=vmem, size = 0x1000, scoped, tag = 'input window, operand 0, single buffered']
    #allocation7 [shape = 's32[1]{0}', space=sflag, size = 0x4, scoped, tag = 'scoped memory for tpu_custom_call.1']
    #allocation8 [shape = 'u8[4096]{0}', space=vmem, size = 0x1000, scoped, tag = 'input window, operand 1, single buffered']
    #allocation9 [shape = 's32[1]{0}', space=sflag, size = 0x4, scoped, tag = 'scoped memory for tpu_custom_call.1']
    #allocation10 [shape = 'u8[4096]{0}', space=vmem, size = 0x1000, scoped, tag = 'input window, operand 2, single buffered']
    #allocation11 [shape = 'u8[32768]{0}', space=vmem, size = 0x8000, scoped, tag = 'input window, operand 3, single buffered']
    #allocation12 [shape = 's32[1]{0}', space=sflag, size = 0x4, scoped, tag = 'scoped memory for tpu_custom_call.1']
    %9 = vsyncpa [#allocation7], 0
    %10 = vsyncpa [#allocation9], 0
    %11 = vsyncpa [#allocation12], 0
    // Predicated region
    $region2: #{tpu_custom_call.1} parent=1 // pred_check
      _
    $region3: #{tpu_custom_call.1} parent=1 // pred_check_branch
      %13 = sbr.rel (0) target = $region5
    $region4: #{tpu_custom_call.1} parent=1 // pred_region
      %15 = vsyncadd [#allocation7], 0
      %s17 = sshll.u32 %s0, 4
      %s18 = int_to_ptr.hbm [resolvable:$true] %s17
      %s19 = sshll.u32 [#allocation6], 4
      %s20 = int_to_ptr.vmem [resolvable:$true] %s19
      %22 = dma.hbm_to_vmem [thread:$0]  %s18, 128, %s20, [#allocation7]
    $region5: #{tpu_custom_call.1} parent=1 // pred_fallthru
      _
    // Predicated region
    $region6: #{tpu_custom_call.1} parent=1 // pred_check
      _
    $region7: #{tpu_custom_call.1} parent=1 // pred_check_branch
      %24 = sbr.rel (0) target = $region9
    $region8: #{tpu_custom_call.1} parent=1 // pred_region
      %26 = vsyncadd [#allocation9], 0
      %s28 = sshll.u32 %s1, 4
      %s29 = int_to_ptr.hbm [resolvable:$true] %s28
      %s30 = sshll.u32 [#allocation8], 4
      %s31 = int_to_ptr.vmem [resolvable:$true] %s30
      %33 = dma.hbm_to_vmem [thread:$0]  %s29, 128, %s31, [#allocation9]
    $region9: #{tpu_custom_call.1} parent=1 // pred_fallthru
      _
    // Predicated region
    $region10: #{tpu_custom_call.1} parent=1 // pred_check
      _
    $region11: #{tpu_custom_call.1} parent=1 // pred_check_branch
      %35 = sbr.rel (0) target = $region13
    $region12: #{tpu_custom_call.1} parent=1 // pred_region
      %37 = vsyncadd [#allocation9], 0
      %s38 = sshll.u32 %s2, 4
      %s39 = int_to_ptr.hbm [resolvable:$true] %s38
      %s40 = sshll.u32 [#allocation10], 4
      %s41 = int_to_ptr.vmem [resolvable:$true] %s40
      %46 = dma.hbm_to_vmem [thread:$0]  %s39, 128, %s41, [#allocation9], 16, 16, 1
    $region13: #{tpu_custom_call.1} parent=1 // pred_fallthru
      _
    // Predicated region
    $region14: #{tpu_custom_call.1} parent=1 // pred_check
      _
    $region15: #{tpu_custom_call.1} parent=1 // pred_check_branch
      %48 = sbr.rel (0) target = $region17
    $region16: #{tpu_custom_call.1} parent=1 // pred_region
      %50 = vsyncadd [#allocation12], 0
      %s51 = sshll.u32 %s3, 4
      %s52 = int_to_ptr.hbm [resolvable:$true] %s51
      %s53 = sshll.u32 [#allocation11], 4
      %s54 = int_to_ptr.vmem [resolvable:$true] %s53
      %59 = dma.hbm_to_vmem [thread:$0]  %s52, 1024, %s54, [#allocation12], 128, 128, 8
    $region17: #{tpu_custom_call.1} parent=1 // pred_fallthru
      _
    // Predicated region
    $region18: #{tpu_custom_call.1} parent=1 // pred_check
      _
    $region19: #{tpu_custom_call.1} parent=1 // pred_check_branch
      %61 = sbr.rel (0) target = $region21
    $region20: #{tpu_custom_call.1} parent=1 // pred_region
      %63 = dma.done [#allocation7], 128
    $region21: #{tpu_custom_call.1} parent=1 // pred_fallthru
      _
    // Predicated region
    $region22: #{tpu_custom_call.1} parent=1 // pred_check
      _
    $region23: #{tpu_custom_call.1} parent=1 // pred_check_branch
      %65 = sbr.rel (0) target = $region25
    $region24: #{tpu_custom_call.1} parent=1 // pred_region
      %67 = dma.done [#allocation9], 128
    $region25: #{tpu_custom_call.1} parent=1 // pred_fallthru
      _
    // Predicated region
    $region26: #{tpu_custom_call.1} parent=1 // pred_check
      _
    $region27: #{tpu_custom_call.1} parent=1 // pred_check_branch
      %69 = sbr.rel (0) target = $region29
    $region28: #{tpu_custom_call.1} parent=1 // pred_region
      %71 = dma.done [#allocation9], 128
    $region29: #{tpu_custom_call.1} parent=1 // pred_fallthru
      _
    // Predicated region
    $region30: #{tpu_custom_call.1} parent=1 // pred_check
      _
    $region31: #{tpu_custom_call.1} parent=1 // pred_check_branch
      %73 = sbr.rel (0) target = $region33
    $region32: #{tpu_custom_call.1} parent=1 // pred_region
      %75 = dma.done [#allocation12], 1024
    $region33: #{tpu_custom_call.1} parent=1 // pred_fallthru
      _
    %p76 = scmp.eq.s32.totalorder 0, 0
    // Predicated region
    $region34: #{tpu_custom_call.1} parent=1 // pred_check
      %p77 = pneg %p76
    $region35: #{tpu_custom_call.1} parent=1 // pred_check_branch
      %79 = sbr.rel (%p77) target = $region37
    $region36: #{tpu_custom_call.1} parent=1 // pred_region
      %v80 = vld [vmem:[#allocation6] sm:$0xff]
      %v81 = vld [vmem:[#allocation8] sm:$0xff]
      %v82 = vmul.f32 %v80, %v80
      %83 = vadd.xlane.f32.xlu0 %v82
      %v84 = vpop.xlane.xlu0 %83
      %v85 = vmul.f32 %v81, %v81
      %86 = vadd.xlane.f32.xlu0 %v85
      %v87 = vpop.xlane.xlu0 %86
      %v88 = vrsqrt.pop %v84
      %v89 = vmul.f32 %v88, %v84
      %v90 = vmul.f32 %v89, %v88
      %v91 = vmul.f32 0.5, %v90
      %v92 = vsub.f32 1.5, %v91
      %v93 = vmul.f32 %v88, %v92
      %vm94 = vweird.f32 %v84
      %vm95 = vweird.f32 %v88
      %vm96 = vmor %vm94, %vm95
      %v97 = vsel %vm96, %v88, %v93
      %v98 = vmin.f32 %v97, 1e+08
      %v99 = vrsqrt.pop %v87
      %v100 = vmul.f32 %v99, %v87
      %v101 = vmul.f32 %v100, %v99
      %v102 = vmul.f32 0.5, %v101
      %v103 = vsub.f32 1.5, %v102
      %v104 = vmul.f32 %v99, %v103
      %vm105 = vweird.f32 %v87
      %vm106 = vweird.f32 %v99
      %vm107 = vmor %vm105, %vm106
      %v108 = vsel %vm107, %v99, %v104
      %v109 = vmin.f32 %v108, 1e+08
      %v110 = vmul.f32 %v80, %v81
      %111 = vadd.xlane.f32.xlu0 %v110
      %v112 = vpop.xlane.xlu0 %111
      %v113 = vmul.f32 %v98, %v109
      %v114 = vmul.f32 %v112, %v113
      %v115 = vmul.f32 %v114, 10.0
      %vm116 = vcmask 7168
      %117 = vst.msk [vmem:[#allocation3] sm:$0xff] %vm116, %v98
      %118 = vst.msk [vmem:[#allocation2] sm:$0xff] %vm116, %v115
      %119 = vst.msk [vmem:[#allocation4] sm:$0xff] %vm116, %v115
      %120 = vst.msk [vmem:[#allocation5] sm:$0xff] %vm116, 1.0
    $region37: #{tpu_custom_call.1} parent=1 // pred_fallthru
      _
    %v121 = vld [vmem:[#allocation11] sm:$0xff]
    %v122 = vld [vmem:[#allocation11 + $0x8] sm:$0xff]
    %v123 = vld [vmem:[#allocation11 + $0x10] sm:$0xff]
    %v124 = vld [vmem:[#allocation11 + $0x18] sm:$0xff]
    %v125 = vld [vmem:[#allocation11 + $0x20] sm:$0xff]
    %v126 = vld [vmem:[#allocation11 + $0x28] sm:$0xff]
    %v127 = vld [vmem:[#allocation11 + $0x30] sm:$0xff]
    %v128 = vld [vmem:[#allocation11 + $0x38] sm:$0xff]
    %v129 = vld [vmem:[#allocation10] sm:$0x1]
    %v130 = vld [vmem:[#allocation10 + $0x1] sm:$0x1]
    %v131 = vld [vmem:[#allocation10 + $0x2] sm:$0x1]
    %v132 = vld [vmem:[#allocation10 + $0x3] sm:$0x1]
    %v133 = vld [vmem:[#allocation10 + $0x4] sm:$0x1]
    %v134 = vld [vmem:[#allocation10 + $0x5] sm:$0x1]
    %v135 = vld [vmem:[#allocation10 + $0x6] sm:$0x1]
    %v136 = vld [vmem:[#allocation10 + $0x7] sm:$0x1]
    %v137 = vmul.f32 %v121, %v121
    %v138 = vmul.f32 %v122, %v122
    %v139 = vmul.f32 %v123, %v123
    %v140 = vmul.f32 %v124, %v124
    %v141 = vmul.f32 %v125, %v125
    %v142 = vmul.f32 %v126, %v126
    %v143 = vmul.f32 %v127, %v127
    %v144 = vmul.f32 %v128, %v128
    %145 = vadd.xlane.f32.xlu0 %v137
    %v146 = vpop.xlane.xlu0 %145
    %147 = vadd.xlane.f32.xlu0 %v138
    %v148 = vpop.xlane.xlu0 %147
    %149 = vadd.xlane.f32.xlu0 %v139
    %v150 = vpop.xlane.xlu0 %149
    %151 = vadd.xlane.f32.xlu0 %v140
    %v152 = vpop.xlane.xlu0 %151
    %153 = vadd.xlane.f32.xlu0 %v141
    %v154 = vpop.xlane.xlu0 %153
    %155 = vadd.xlane.f32.xlu0 %v142
    %v156 = vpop.xlane.xlu0 %155
    %157 = vadd.xlane.f32.xlu0 %v143
    %v158 = vpop.xlane.xlu0 %157
    %159 = vadd.xlane.f32.xlu0 %v144
    %v160 = vpop.xlane.xlu0 %159
    %v169 = vperm.slane %v129, 0
    %v170 = vperm.slane %v130, 0
    %v171 = vperm.slane %v131, 0
    %v172 = vperm.slane %v132, 0
    %v173 = vperm.slane %v133, 0
    %v174 = vperm.slane %v134, 0
    %v175 = vperm.slane %v135, 0
    %v176 = vperm.slane %v136, 0
    %v185 = vmul.f32 %v121, %v169
    %v186 = vmul.f32 %v122, %v170
    %v187 = vmul.f32 %v123, %v171
    %v188 = vmul.f32 %v124, %v172
    %v189 = vmul.f32 %v125, %v173
    %v190 = vmul.f32 %v126, %v174
    %v191 = vmul.f32 %v127, %v175
    %v192 = vmul.f32 %v128, %v176
    %193 = vadd.xlane.f32.xlu0 %v185
    %v194 = vpop.xlane.xlu0 %193
    %195 = vadd.xlane.f32.xlu0 %v186
    %v196 = vpop.xlane.xlu0 %195
    %197 = vadd.xlane.f32.xlu0 %v187
    %v198 = vpop.xlane.xlu0 %197
    %199 = vadd.xlane.f32.xlu0 %v188
    %v200 = vpop.xlane.xlu0 %199
    %201 = vadd.xlane.f32.xlu0 %v189
    %v202 = vpop.xlane.xlu0 %201
    %203 = vadd.xlane.f32.xlu0 %v190
    %v204 = vpop.xlane.xlu0 %203
    %205 = vadd.xlane.f32.xlu0 %v191
    %v206 = vpop.xlane.xlu0 %205
    %207 = vadd.xlane.f32.xlu0 %v192
    %v208 = vpop.xlane.xlu0 %207
    %v209 = vrsqrt.pop %v146
    %v210 = vmul.f32 %v209, %v146
    %v211 = vmul.f32 %v210, %v209
    %v212 = vmul.f32 0.5, %v211
    %v213 = vsub.f32 1.5, %v212
    %v214 = vmul.f32 %v209, %v213
    %vm215 = vweird.f32 %v146
    %vm216 = vweird.f32 %v209
    %vm217 = vmor %vm215, %vm216
    %v218 = vsel %vm217, %v209, %v214
    %v219 = vrsqrt.pop %v148
    %v220 = vmul.f32 %v219, %v148
    %v221 = vmul.f32 %v220, %v219
    %v222 = vmul.f32 0.5, %v221
    %v223 = vsub.f32 1.5, %v222
    %v224 = vmul.f32 %v219, %v223
    %vm225 = vweird.f32 %v148
    %vm226 = vweird.f32 %v219
    %vm227 = vmor %vm225, %vm226
    %v228 = vsel %vm227, %v219, %v224
    %v229 = vrsqrt.pop %v150
    %v230 = vmul.f32 %v229, %v150
    %v231 = vmul.f32 %v230, %v229
    %v232 = vmul.f32 0.5, %v231
    %v233 = vsub.f32 1.5, %v232
    %v234 = vmul.f32 %v229, %v233
    %vm235 = vweird.f32 %v150
    %vm236 = vweird.f32 %v229
    %vm237 = vmor %vm235, %vm236
    %v238 = vsel %vm237, %v229, %v234
    %v239 = vrsqrt.pop %v152
    %v240 = vmul.f32 %v239, %v152
    %v241 = vmul.f32 %v240, %v239
    %v242 = vmul.f32 0.5, %v241
    %v243 = vsub.f32 1.5, %v242
    %v244 = vmul.f32 %v239, %v243
    %vm245 = vweird.f32 %v152
    %vm246 = vweird.f32 %v239
    %vm247 = vmor %vm245, %vm246
    %v248 = vsel %vm247, %v239, %v244
    %v249 = vrsqrt.pop %v154
    %v250 = vmul.f32 %v249, %v154
    %v251 = vmul.f32 %v250, %v249
    %v252 = vmul.f32 0.5, %v251
    %v253 = vsub.f32 1.5, %v252
    %v254 = vmul.f32 %v249, %v253
    %vm255 = vweird.f32 %v154
    %vm256 = vweird.f32 %v249
    %vm257 = vmor %vm255, %vm256
    %v258 = vsel %vm257, %v249, %v254
    %v259 = vrsqrt.pop %v156
    %v260 = vmul.f32 %v259, %v156
    %v261 = vmul.f32 %v260, %v259
    %v262 = vmul.f32 0.5, %v261
    %v263 = vsub.f32 1.5, %v262
    %v264 = vmul.f32 %v259, %v263
    %vm265 = vweird.f32 %v156
    %vm266 = vweird.f32 %v259
    %vm267 = vmor %vm265, %vm266
    %v268 = vsel %vm267, %v259, %v264
    %v269 = vrsqrt.pop %v158
    %v270 = vmul.f32 %v269, %v158
    %v271 = vmul.f32 %v270, %v269
    %v272 = vmul.f32 0.5, %v271
    %v273 = vsub.f32 1.5, %v272
    %v274 = vmul.f32 %v269, %v273
    %vm275 = vweird.f32 %v158
    %vm276 = vweird.f32 %v269
    %vm277 = vmor %vm275, %vm276
    %v278 = vsel %vm277, %v269, %v274
    %v279 = vrsqrt.pop %v160
    %v280 = vmul.f32 %v279, %v160
    %v281 = vmul.f32 %v280, %v279
    %v282 = vmul.f32 0.5, %v281
    %v283 = vsub.f32 1.5, %v282
    %v284 = vmul.f32 %v279, %v283
    %vm285 = vweird.f32 %v160
    %vm286 = vweird.f32 %v279
    %vm287 = vmor %vm285, %vm286
    %v288 = vsel %vm287, %v279, %v284
    %v289 = vmin.f32 %v218, 1e+08
    %v290 = vmin.f32 %v228, 1e+08
    %v291 = vmin.f32 %v238, 1e+08
    %v292 = vmin.f32 %v248, 1e+08
    %v293 = vmin.f32 %v258, 1e+08
    %v294 = vmin.f32 %v268, 1e+08
    %v295 = vmin.f32 %v278, 1e+08
    %v296 = vmin.f32 %v288, 1e+08
    %v297 = vld [vmem:[#allocation3] sm:$0xff]
    %299 = vset.pattern.permute.xlu0 0
    %300 = vperm.xlu0 %299, %v297
    %v301 = vpop.permute.xlu0 %300
    %v311 = vlaneseq
    %v312 = vand.u32 %v311, 127
    %v313 = vperm.slane %v289, %v312
    %v314 = vperm.slane %v290, %v312
    %v315 = vperm.slane %v291, %v312
    %v316 = vperm.slane %v292, %v312
    %v317 = vperm.slane %v293, %v312
    %v318 = vperm.slane %v294, %v312
    %v319 = vperm.slane %v295, %v312
    %v320 = vperm.slane %v296, %v312
    %vm321 = vcmask 1041409
    %v322 = vsel %vm321, %v314, %v313
    %vm323 = vcmask 1042434
    %v324 = vsel %vm323, %v315, %v322
    %vm325 = vcmask 1043459
    %v326 = vsel %vm325, %v316, %v324
    %vm327 = vcmask 1044484
    %v328 = vsel %vm327, %v317, %v326
    %vm329 = vcmask 1045509
    %v330 = vsel %vm329, %v318, %v328
    %vm331 = vcmask 1046534
    %v332 = vsel %vm331, %v319, %v330
    %vm333 = vcmask 1047559
    %v334 = vsel %vm333, %v320, %v332
    %v336 = vmul.f32 %v301, %v334
    %v338 = vperm.slane %v336, 0
    %v339 = vlaneseq
    %v340 = vshrl.u32 %v339, 7
    %342 = vset.pattern.permute.xlu0 %v340
    %343 = vperm.xlu0 %342, %v338
    %v344 = vpop.permute.xlu0 %343
    %v345 = vperm.slane %v336, 1
    %v346 = vlaneseq
    %v347 = vshrl.u32 %v346, 7
    %349 = vset.pattern.permute.xlu0 %v347
    %350 = vperm.xlu0 %349, %v345
    %v351 = vpop.permute.xlu0 %350
    %v352 = vperm.slane %v336, 2
    %v353 = vlaneseq
    %v354 = vshrl.u32 %v353, 7
    %356 = vset.pattern.permute.xlu0 %v354
    %357 = vperm.xlu0 %356, %v352
    %v358 = vpop.permute.xlu0 %357
    %v359 = vperm.slane %v336, 3
    %v360 = vlaneseq
    %v361 = vshrl.u32 %v360, 7
    %363 = vset.pattern.permute.xlu0 %v361
    %364 = vperm.xlu0 %363, %v359
    %v365 = vpop.permute.xlu0 %364
    %v366 = vperm.slane %v336, 4
    %v367 = vlaneseq
    %v368 = vshrl.u32 %v367, 7
    %370 = vset.pattern.permute.xlu0 %v368
    %371 = vperm.xlu0 %370, %v366
    %v372 = vpop.permute.xlu0 %371
    %v373 = vperm.slane %v336, 5
    %v374 = vlaneseq
    %v375 = vshrl.u32 %v374, 7
    %377 = vset.pattern.permute.xlu0 %v375
    %378 = vperm.xlu0 %377, %v373
    %v379 = vpop.permute.xlu0 %378
    %v380 = vperm.slane %v336, 6
    %v381 = vlaneseq
    %v382 = vshrl.u32 %v381, 7
    %384 = vset.pattern.permute.xlu0 %v382
    %385 = vperm.xlu0 %384, %v380
    %v386 = vpop.permute.xlu0 %385
    %v387 = vperm.slane %v336, 7
    %v388 = vlaneseq
    %v389 = vshrl.u32 %v388, 7
    %391 = vset.pattern.permute.xlu0 %v389
    %392 = vperm.xlu0 %391, %v387
    %v393 = vpop.permute.xlu0 %392
    %v402 = vmul.f32 %v194, %v344
    %v403 = vmul.f32 %v196, %v351
    %v404 = vmul.f32 %v198, %v358
    %v405 = vmul.f32 %v200, %v365
    %v406 = vmul.f32 %v202, %v372
    %v407 = vmul.f32 %v204, %v379
    %v408 = vmul.f32 %v206, %v386
    %v409 = vmul.f32 %v208, %v393
    %v410 = vmul.f32 %v402, 10.0
    %v411 = vmul.f32 %v403, 10.0
    %v412 = vmul.f32 %v404, 10.0
    %v413 = vmul.f32 %v405, 10.0
    %v414 = vmul.f32 %v406, 10.0
    %v415 = vmul.f32 %v407, 10.0
    %v416 = vmul.f32 %v408, 10.0
    %v417 = vmul.f32 %v409, 10.0
    %v418 = vld [vmem:[#allocation4] sm:$0xff]
    %427 = vset.pattern.permute.xlu0 0
    %428 = vperm.xlu0 %427, %v410
    %v429 = vpop.permute.xlu0 %428
    %430 = vset.pattern.permute.xlu0 0
    %431 = vperm.xlu0 %430, %v411
    %v432 = vpop.permute.xlu0 %431
    %433 = vset.pattern.permute.xlu0 0
    %434 = vperm.xlu0 %433, %v412
    %v435 = vpop.permute.xlu0 %434
    %436 = vset.pattern.permute.xlu0 0
    %437 = vperm.xlu0 %436, %v413
    %v438 = vpop.permute.xlu0 %437
    %439 = vset.pattern.permute.xlu0 0
    %440 = vperm.xlu0 %439, %v414
    %v441 = vpop.permute.xlu0 %440
    %442 = vset.pattern.permute.xlu0 0
    %443 = vperm.xlu0 %442, %v415
    %v444 = vpop.permute.xlu0 %443
    %445 = vset.pattern.permute.xlu0 0
    %446 = vperm.xlu0 %445, %v416
    %v447 = vpop.permute.xlu0 %446
    %448 = vset.pattern.permute.xlu0 0
    %449 = vperm.xlu0 %448, %v417
    %v450 = vpop.permute.xlu0 %449
    %v451 = vperm.slane %v429, %v312
    %v452 = vperm.slane %v432, %v312
    %v453 = vperm.slane %v435, %v312
    %v454 = vperm.slane %v438, %v312
    %v455 = vperm.slane %v441, %v312
    %v456 = vperm.slane %v444, %v312
    %v457 = vperm.slane %v447, %v312
    %v458 = vperm.slane %v450, %v312
    %v459 = vsel %vm321, %v452, %v451
    %v460 = vsel %vm323, %v453, %v459
    %v461 = vsel %vm325, %v454, %v460
    %v462 = vsel %vm327, %v455, %v461
    %v463 = vsel %vm329, %v456, %v462
    %v464 = vsel %vm331, %v457, %v463
    %v465 = vsel %vm333, %v458, %v464
    %vm467 = vcmask 64512
    %v468 = vsel %vm467, %v465, -inf
    %469 = vmax.xlane.f32.xlu0 %v468
    %v470 = vpop.xlane.xlu0 %469
    %v471 = vmax.f32 %v418, %v470
    %v472 = vld [vmem:[#allocation5] sm:$0xff]
    %v473 = vsub.f32 %v418, %v471
    %v474 = vmul.f32 %v473, 1.442695
    %v475 = vpow.pop %v474
    %v476 = vmul.f32 %v472, %v475
    %478 = vset.pattern.permute.xlu0 0
    %479 = vperm.xlu0 %478, %v471
    %v480 = vpop.permute.xlu0 %479
    %v481 = vperm.slane %v480, 0
    %v482 = vperm.slane %v480, 1
    %v483 = vperm.slane %v480, 2
    %v484 = vperm.slane %v480, 3
    %v485 = vperm.slane %v480, 4
    %v486 = vperm.slane %v480, 5
    %v487 = vperm.slane %v480, 6
    %v488 = vperm.slane %v480, 7
    %v497 = vsub.f32 %v410, %v481
    %v498 = vsub.f32 %v411, %v482
    %v499 = vsub.f32 %v412, %v483
    %v500 = vsub.f32 %v413, %v484
    %v501 = vsub.f32 %v414, %v485
    %v502 = vsub.f32 %v415, %v486
    %v503 = vsub.f32 %v416, %v487
    %v504 = vsub.f32 %v417, %v488
    %v505 = vmul.f32 %v497, 1.442695
    %v506 = vpow.pop %v505
    %v507 = vmul.f32 %v498, 1.442695
    %v508 = vpow.pop %v507
    %v509 = vmul.f32 %v499, 1.442695
    %v510 = vpow.pop %v509
    %v511 = vmul.f32 %v500, 1.442695
    %v512 = vpow.pop %v511
    %v513 = vmul.f32 %v501, 1.442695
    %v514 = vpow.pop %v513
    %v515 = vmul.f32 %v502, 1.442695
    %v516 = vpow.pop %v515
    %v517 = vmul.f32 %v503, 1.442695
    %v518 = vpow.pop %v517
    %v519 = vmul.f32 %v504, 1.442695
    %v520 = vpow.pop %v519
    %529 = vset.pattern.permute.xlu0 0
    %530 = vperm.xlu0 %529, %v506
    %v531 = vpop.permute.xlu0 %530
    %532 = vset.pattern.permute.xlu0 0
    %533 = vperm.xlu0 %532, %v508
    %v534 = vpop.permute.xlu0 %533
    %535 = vset.pattern.permute.xlu0 0
    %536 = vperm.xlu0 %535, %v510
    %v537 = vpop.permute.xlu0 %536
    %538 = vset.pattern.permute.xlu0 0
    %539 = vperm.xlu0 %538, %v512
    %v540 = vpop.permute.xlu0 %539
    %541 = vset.pattern.permute.xlu0 0
    %542 = vperm.xlu0 %541, %v514
    %v543 = vpop.permute.xlu0 %542
    %544 = vset.pattern.permute.xlu0 0
    %545 = vperm.xlu0 %544, %v516
    %v546 = vpop.permute.xlu0 %545
    %547 = vset.pattern.permute.xlu0 0
    %548 = vperm.xlu0 %547, %v518
    %v549 = vpop.permute.xlu0 %548
    %550 = vset.pattern.permute.xlu0 0
    %551 = vperm.xlu0 %550, %v520
    %v552 = vpop.permute.xlu0 %551
    %v553 = vperm.slane %v531, %v312
    %v554 = vperm.slane %v534, %v312
    %v555 = vperm.slane %v537, %v312
    %v556 = vperm.slane %v540, %v312
    %v557 = vperm.slane %v543, %v312
    %v558 = vperm.slane %v546, %v312
    %v559 = vperm.slane %v549, %v312
    %v560 = vperm.slane %v552, %v312
    %v561 = vsel %vm321, %v554, %v553
    %v562 = vsel %vm323, %v555, %v561
    %v563 = vsel %vm325, %v556, %v562
    %v564 = vsel %vm327, %v557, %v563
    %v565 = vsel %vm329, %v558, %v564
    %v566 = vsel %vm331, %v559, %v565
    %v567 = vsel %vm333, %v560, %v566
    %v569 = vsel %vm467, %v567, 0.0
    %570 = vadd.xlane.f32.xlu0 %v569
    %v571 = vpop.xlane.xlu0 %570
    %v572 = vadd.f32 %v476, %v571
    %vm573 = vcmask 7168
    %574 = vst.msk [vmem:[#allocation5] sm:$0xff] %vm573, %v572
    %575 = vst.msk [vmem:[#allocation4] sm:$0xff] %vm573, %v471
    // Predicated region
    $region38: #{tpu_custom_call.1} parent=1 // pred_check
      %p576 = pneg %p76
    $region39: #{tpu_custom_call.1} parent=1 // pred_check_branch
      %578 = sbr.rel (%p576) target = $region41
    $region40: #{tpu_custom_call.1} parent=1 // pred_region
      %v579 = vld [vmem:[#allocation4] sm:$0xff]
      %v580 = vld [vmem:[#allocation5] sm:$0xff]
      %v581 = vlog2.pop %v580
      %v582 = vmul.f32 %v581, 0.6931472
      %v583 = vadd.f32 %v579, %v582
      %v584 = vld [vmem:[#allocation2] sm:$0xff]
      %v585 = vsub.f32 %v583, %v584
      %586 = vst.msk [vmem:[%s4] sm:$0xff] %vm573, %v585
    $region41: #{tpu_custom_call.1} parent=1 // pred_fallthru
      _
    // Predicated region
    $region42: #{tpu_custom_call.1} parent=1 // pred_check
      _
    $region43: #{tpu_custom_call.1} parent=1 // pred_check_branch
      %588 = sbr.rel (0) target = $region45
    $region44: #{tpu_custom_call.1} parent=1 // pred_region
      _
    $region45: #{tpu_custom_call.1} parent=1 // pred_fallthru
      _
    // Predicated region
    $region46: #{tpu_custom_call.1} parent=1 // pred_check
      _
    $region47: #{tpu_custom_call.1} parent=1 // pred_check_branch
      %590 = sbr.rel (0) target = $region49
    $region48: #{tpu_custom_call.1} parent=1 // pred_region
      _
    $region49: #{tpu_custom_call.1} parent=1 // pred_fallthru
      _
    %591 = vsyncpa [#allocation7], 1
    %592 = vsyncpa [#allocation9], 1
    %593 = vsyncpa [#allocation12], 1

</llo_original>
